<compile_context>
chip_gen: v7x
topology: tpu7x:2x2x1
jax: 0.10.0
libtpu: 0.0.40
codegen_flags: <defaults>
</compile_context>

<pallas_src>
import functools

import jax
import jax.numpy as jnp
from jax.experimental import pallas as pl
from jax.experimental.pallas import tpu as pltpu

_SUBLANE = 8
_TARGET_BLOCK_BYTES = 2 * 1024 * 1024   # ~2 MiB per stream per block (f32 sizing)
_WHOLE_ARRAY_BYTES = 2 * 1024 * 1024    # per-stream cap for the single-block path


def _make_fd4_kernel(dx: float):
    inv = 1.0 / float(dx) ** 4
    c_p2 = 1.0 * inv
    c_p1 = -4.0 * inv
    c_0 = 6.0 * inv
    c_m1 = -4.0 * inv
    c_m2 = 1.0 * inv

    def kernel(up2_ref, up1_ref, u0_ref, um1_ref, um2_ref, out_ref):
        # Upcast in vregs (no-op for f32 inputs).  Same term order as the reference
        # module, so f32 results match bitwise.  Factoring to
        # inv*((u+2 + u-2) - 4*(u+1 + u-1) + 6*u) would save 2 VALU multiplies, but
        # the kernel is memory-bound so we keep the reference-exact grouping.
        res = (
            c_p2 * up2_ref[...].astype(jnp.float32)
            + c_p1 * up1_ref[...].astype(jnp.float32)
            + c_0 * u0_ref[...].astype(jnp.float32)
            + c_m1 * um1_ref[...].astype(jnp.float32)
            + c_m2 * um2_ref[...].astype(jnp.float32)
        )
        out_ref[...] = res.astype(out_ref.dtype)

    return kernel


def _choose_layout(n: int, itemsize: int):
    """Pick (lane_width, rows, block_rows, pad_elems) for a flattened field."""
    bytes_per_elem = max(itemsize, 4)

    lane_width = None
    rows = 0
    pad = 0

    # 1) Widest lane dim that tiles the flat size exactly with rows % 8 == 0
    #    (unmasked stores, zero wrapper-side data movement).
    for cand in (2048, 1024, 512, 256, 128):
        if n % cand == 0 and (n // cand) % _SUBLANE == 0:
            lane_width = cand
            rows = n // cand
            break

    if lane_width is None:
        # 2) Small arrays: one whole-array block.  When block_shape == full array
        #    dims, the (8,128) divisibility rule does not apply, so no padding is
        #    needed.  Still prefer a wide lane dim when one divides n.
        if n * bytes_per_elem <= _WHOLE_ARRAY_BYTES:
            for cand in (2048, 1024, 512, 256, 128):
                if n % cand == 0:
                    return cand, n // cand, n // cand, 0
            return n, 1, 1, 0

        # 3) Large awkward sizes: pad up to an (8k, 512) slab.
        # TODO(synk): handle the ragged tail inside the kernel with a masked store
        # instead of this wrapper-side pad; only hit for awkward large sizes.
        lane_width = 512
        rows = -(-n // lane_width)
        rows = ((rows + _SUBLANE - 1) // _SUBLANE) * _SUBLANE
        pad = rows * lane_width - n

    # Block rows: largest multiple-of-8 divisor of rows giving ~<=2 MiB blocks.
    target_rows = max(_SUBLANE, _TARGET_BLOCK_BYTES // (lane_width * bytes_per_elem))
    target_rows = min(target_rows, rows)
    target_rows -= target_rows % _SUBLANE
    block_rows = _SUBLANE
    d = target_rows
    while d >= _SUBLANE:
        if rows % d == 0:
            block_rows = d
            break
        d -= _SUBLANE
    return lane_width, rows, block_rows, pad


@functools.partial(jax.jit, static_argnames=("dx",))
def _fd4_pallas(up2, up1, u0, um1, um2, *, dx):
    # NOTE: dx is static here -> each distinct dx value triggers a recompile.
    # If dx varies per-step at runtime, pass 1/dx^4 as a traced SMEM scalar instead.
    orig_shape = u0.shape
    out_dtype = jnp.result_type(up2.dtype, up1.dtype, u0.dtype, um1.dtype, um2.dtype)
    n = u0.size

    lane_width, rows, block_rows, pad = _choose_layout(
        n, jnp.dtype(out_dtype).itemsize
    )

    def prep(x):
        x = x.reshape(-1)
        if pad:
            x = jnp.pad(x, (0, pad))
        return x.reshape(rows, lane_width)

    xs = [prep(x) for x in (up2, up1, u0, um1, um2)]
    grid = (rows // block_rows,)
    block = pl.BlockSpec((block_rows, lane_width), lambda i: (i, 0))

    out = pl.pallas_call(
        _make_fd4_kernel(dx),
        out_shape=jax.ShapeDtypeStruct((rows, lane_width), out_dtype),
        grid=grid,
        in_specs=[block] * 5,
        out_specs=block,
        compiler_params=pltpu.CompilerParams(
            dimension_semantics=("parallel",),
            vmem_limit_bytes=48 * 1024 * 1024,
        ),
    )(*xs)

    out = out.reshape(-1)
    if pad:
        out = out[:n]
    return out.reshape(orig_shape)


class FourthDerivSecondOrder:
    """JAX/Pallas port of the PyTorch module: 4th derivative, 2nd-order stencil."""

    def __init__(self, var: str, indep_var: str, out_name: str) -> None:
        self.var = var
        self.indep_var = indep_var
        self.out_name = out_name

    def __call__(self, inputs, dx: float):
        up2 = inputs[f"{self.var}>>{self.indep_var}::2"]
        up1 = inputs[f"{self.var}>>{self.indep_var}::1"]
        u0 = inputs[f"{self.var}"]
        um1 = inputs[f"{self.var}>>{self.indep_var}::-1"]
        um2 = inputs[f"{self.var}>>{self.indep_var}::-2"]
        out = _fd4_pallas(up2, up1, u0, um1, um2, dx=float(dx))
        return {self.out_name: out}


if __name__ == "__main__":
    # Small NCHW fields, consistent with the module's use on gridded data.
    B, C, H, W = 2, 4, 16, 16
    key = jax.random.PRNGKey(0)
    ks = jax.random.split(key, 5)
    var, indep = "u", "x"
    inputs = {
        f"{var}>>{indep}::2": jax.random.normal(ks[0], (B, C, H, W), jnp.float32),
        f"{var}>>{indep}::1": jax.random.normal(ks[1], (B, C, H, W), jnp.float32),
        f"{var}": jax.random.normal(ks[2], (B, C, H, W), jnp.float32),
        f"{var}>>{indep}::-1": jax.random.normal(ks[3], (B, C, H, W), jnp.float32),
        f"{var}>>{indep}::-2": jax.random.normal(ks[4], (B, C, H, W), jnp.float32),
    }
    dx = 0.1

    mod = FourthDerivSecondOrder(var, indep, "u__x__x__x__x")
    out = mod(inputs, dx)["u__x__x__x__x"]
    out = jax.block_until_ready(out)

    # Reference in plain JAX (same formula / term order as the PyTorch forward).
    inv = 1.0 / dx ** 4
    ref = (
        1.0 * inv * inputs[f"{var}>>{indep}::2"]
        + (-4.0 * inv) * inputs[f"{var}>>{indep}::1"]
        + 6.0 * inv * inputs[f"{var}"]
        + (-4.0 * inv) * inputs[f"{var}>>{indep}::-1"]
        + 1.0 * inv * inputs[f"{var}>>{indep}::-2"]
    )
    assert out.shape == (B, C, H, W)
    assert out.dtype == jnp.float32
    max_err = float(jnp.max(jnp.abs(out - ref)))
    # Coefficients are ~6e4, so 1e-2 absolute is ~1 ulp of the summed terms.
    assert jnp.allclose(out, ref, rtol=1e-5, atol=1e-2), f"max abs err {max_err}"
    print("KERNEL_OK")
</pallas_src>

<mosaic_0001>
module attributes {stable_mosaic.version = 11 : i64} {
  func.func @kernel(%arg0: i32, %arg1: memref<8x256xf32, #tpu.memory_space<vmem>>, %arg2: memref<8x256xf32, #tpu.memory_space<vmem>>, %arg3: memref<8x256xf32, #tpu.memory_space<vmem>>, %arg4: memref<8x256xf32, #tpu.memory_space<vmem>>, %arg5: memref<8x256xf32, #tpu.memory_space<vmem>>, %arg6: memref<8x256xf32, #tpu.memory_space<vmem>>) attributes {dimension_semantics = [#tpu.dimension_semantics<parallel>], iteration_bounds = array<i64: 1>, scalar_prefetch = 0 : i64, scratch_operands = 0 : i64, tpu.core_type = #tpu.core_type<tc>, window_params = [{transform_indices = @transform_0, window_bounds = array<i64: 8, 256>}, {transform_indices = @transform_1, window_bounds = array<i64: 8, 256>}, {transform_indices = @transform_2, window_bounds = array<i64: 8, 256>}, {transform_indices = @transform_3, window_bounds = array<i64: 8, 256>}, {transform_indices = @transform_4, window_bounds = array<i64: 8, 256>}, {transform_indices = @transform_5, window_bounds = array<i64: 8, 256>}]} {
    %c0 = arith.constant 0 : index
    %c0_0 = arith.constant 0 : index
    %0 = vector.load %arg1[%c0, %c0_0] : memref<8x256xf32, #tpu.memory_space<vmem>>, vector<8x256xf32>
    %cst = arith.constant 1.000000e+04 : f32
    %1 = vector.broadcast %cst : f32 to vector<8x256xf32>
    %2 = arith.mulf %1, %0 : vector<8x256xf32>
    %c0_1 = arith.constant 0 : index
    %c0_2 = arith.constant 0 : index
    %3 = vector.load %arg2[%c0_1, %c0_2] : memref<8x256xf32, #tpu.memory_space<vmem>>, vector<8x256xf32>
    %cst_3 = arith.constant -4.000000e+04 : f32
    %4 = vector.broadcast %cst_3 : f32 to vector<8x256xf32>
    %5 = arith.mulf %4, %3 : vector<8x256xf32>
    %6 = arith.addf %2, %5 : vector<8x256xf32>
    %c0_4 = arith.constant 0 : index
    %c0_5 = arith.constant 0 : index
    %7 = vector.load %arg3[%c0_4, %c0_5] : memref<8x256xf32, #tpu.memory_space<vmem>>, vector<8x256xf32>
    %cst_6 = arith.constant 6.000000e+04 : f32
    %8 = vector.broadcast %cst_6 : f32 to vector<8x256xf32>
    %9 = arith.mulf %8, %7 : vector<8x256xf32>
    %10 = arith.addf %6, %9 : vector<8x256xf32>
    %c0_7 = arith.constant 0 : index
    %c0_8 = arith.constant 0 : index
    %11 = vector.load %arg4[%c0_7, %c0_8] : memref<8x256xf32, #tpu.memory_space<vmem>>, vector<8x256xf32>
    %cst_9 = arith.constant -4.000000e+04 : f32
    %12 = vector.broadcast %cst_9 : f32 to vector<8x256xf32>
    %13 = arith.mulf %12, %11 : vector<8x256xf32>
    %14 = arith.addf %10, %13 : vector<8x256xf32>
    %c0_10 = arith.constant 0 : index
    %c0_11 = arith.constant 0 : index
    %15 = vector.load %arg5[%c0_10, %c0_11] : memref<8x256xf32, #tpu.memory_space<vmem>>, vector<8x256xf32>
    %cst_12 = arith.constant 1.000000e+04 : f32
    %16 = vector.broadcast %cst_12 : f32 to vector<8x256xf32>
    %17 = arith.mulf %16, %15 : vector<8x256xf32>
    %18 = arith.addf %14, %17 : vector<8x256xf32>
    %c0_13 = arith.constant 0 : index
    %c0_14 = arith.constant 0 : index
    %19 = vector.load %arg6[%c0_13, %c0_14] : memref<8x256xf32, #tpu.memory_space<vmem>>, vector<8x256xf32>
    tpu.vector_store %arg6[%c0_13, %c0_14], %18 {strides = array<i32>} : memref<8x256xf32, #tpu.memory_space<vmem>>, vector<8x256xf32>,
    return
  }
  func.func @transform_0(%arg0: i32) -> (i32, i32) {
    %c0_i32 = arith.constant 0 : i32
    %c0_i32_0 = arith.constant 0 : i32
    return %arg0, %c0_i32 : i32, i32
  }
  func.func @transform_1(%arg0: i32) -> (i32, i32) {
    %c0_i32 = arith.constant 0 : i32
    %c0_i32_0 = arith.constant 0 : i32
    return %arg0, %c0_i32 : i32, i32
  }
  func.func @transform_2(%arg0: i32) -> (i32, i32) {
    %c0_i32 = arith.constant 0 : i32
    %c0_i32_0 = arith.constant 0 : i32
    return %arg0, %c0_i32 : i32, i32
  }
  func.func @transform_3(%arg0: i32) -> (i32, i32) {
    %c0_i32 = arith.constant 0 : i32
    %c0_i32_0 = arith.constant 0 : i32
    return %arg0, %c0_i32 : i32, i32
  }
  func.func @transform_4(%arg0: i32) -> (i32, i32) {
    %c0_i32 = arith.constant 0 : i32
    %c0_i32_0 = arith.constant 0 : i32
    return %arg0, %c0_i32 : i32, i32
  }
  func.func @transform_5(%arg0: i32) -> (i32, i32) {
    %c0_i32 = arith.constant 0 : i32
    %c0_i32_0 = arith.constant 0 : i32
    return %arg0, %c0_i32 : i32, i32
  }
}

</mosaic_0001>

<llo_original>
// kernel: _fd4_pallas.1
$region0: #{_fd4_pallas.1}
  #allocation0 [shape = 'u32[]', space=smem, size = 0x4, offset = 0x4, fixed_abs, tag = 'smem constant byte address 0x4 - core index']
  #allocation1 [shape = 'u32[144,128]{1,0:T(1,128)}', space=vmem, size = 0x12000, scoped, tag = 'internal scratch']
  %s0 = inlined_call_operand.vmem [shape: f32[8,256], index: 0, kind: input, shape index: {}]
  %s1 = inlined_call_operand.vmem [shape: f32[8,256], index: 1, kind: input, shape index: {}]
  %s2 = inlined_call_operand.vmem [shape: f32[8,256], index: 2, kind: input, shape index: {}]
  %s3 = inlined_call_operand.vmem [shape: f32[8,256], index: 3, kind: input, shape index: {}]
  %s4 = inlined_call_operand.vmem [shape: f32[8,256], index: 4, kind: input, shape index: {}]
  %s5 = inlined_call_operand.vmem [shape: f32[8,256], index: 5, kind: output, shape index: {}]
  %s6 = sld [smem:[#allocation0]]
  $region30: #{_fd4_pallas.1} parent=0
    _
  %s8 = ssub.s32 1, %s6
  %s9 = scalar_select 0, %s8, %s6
  // Predicated region
  $region2: #{_fd4_pallas.1} parent=0 // pred_check
    _
  $region3: #{_fd4_pallas.1} parent=0 // pred_check_branch
    %11 = sbr.rel (0) target = $region5
  $region4: #{_fd4_pallas.1} parent=0 // pred_region
    _
  $region5: #{_fd4_pallas.1} parent=0 // pred_fallthru
    _
  // Predicated region
  $region6: #{_fd4_pallas.1} parent=0 // pred_check
    _
  $region7: #{_fd4_pallas.1} parent=0 // pred_check_branch
    %13 = sbr.rel (0) target = $region9
  $region8: #{_fd4_pallas.1} parent=0 // pred_region
    _
  $region9: #{_fd4_pallas.1} parent=0 // pred_fallthru
    _
  // Predicated region
  $region10: #{_fd4_pallas.1} parent=0 // pred_check
    _
  $region11: #{_fd4_pallas.1} parent=0 // pred_check_branch
    %15 = sbr.rel (0) target = $region13
  $region12: #{_fd4_pallas.1} parent=0 // pred_region
    _
  $region13: #{_fd4_pallas.1} parent=0 // pred_fallthru
    _
  // Predicated region
  $region14: #{_fd4_pallas.1} parent=0 // pred_check
    _
  $region15: #{_fd4_pallas.1} parent=0 // pred_check_branch
    %17 = sbr.rel (0) target = $region17
  $region16: #{_fd4_pallas.1} parent=0 // pred_region
    _
  $region17: #{_fd4_pallas.1} parent=0 // pred_fallthru
    _
  // Predicated region
  $region18: #{_fd4_pallas.1} parent=0 // pred_check
    _
  $region19: #{_fd4_pallas.1} parent=0 // pred_check_branch
    %19 = sbr.rel (0) target = $region21
  $region20: #{_fd4_pallas.1} parent=0 // pred_region
    _
  $region21: #{_fd4_pallas.1} parent=0 // pred_fallthru
    _
  %v20 = vld [vmem:[%s0] sm:$0xff]
  %v21 = vld [vmem:[%s0 + $0x8] sm:$0xff]
  %v22 = vmul.f32 %v20, 10000.0
  %v23 = vmul.f32 %v21, 10000.0
  %v24 = vld [vmem:[%s1] sm:$0xff]
  %v25 = vld [vmem:[%s1 + $0x8] sm:$0xff]
  %v26 = vmul.f32 %v24, -40000.0
  %v27 = vmul.f32 %v25, -40000.0
  %v28 = vadd.f32 %v22, %v26
  %v29 = vadd.f32 %v23, %v27
  %v30 = vld [vmem:[%s2] sm:$0xff]
  %v31 = vld [vmem:[%s2 + $0x8] sm:$0xff]
  %v32 = vmul.f32 %v30, 60000.0
  %v33 = vmul.f32 %v31, 60000.0
  %v34 = vadd.f32 %v28, %v32
  %v35 = vadd.f32 %v29, %v33
  %v36 = vld [vmem:[%s3] sm:$0xff]
  %v37 = vld [vmem:[%s3 + $0x8] sm:$0xff]
  %v38 = vmul.f32 %v36, -40000.0
  %v39 = vmul.f32 %v37, -40000.0
  %v40 = vadd.f32 %v34, %v38
  %v41 = vadd.f32 %v35, %v39
  %v42 = vld [vmem:[%s4] sm:$0xff]
  %v43 = vld [vmem:[%s4 + $0x8] sm:$0xff]
  %v44 = vmul.f32 %v42, 10000.0
  %v45 = vmul.f32 %v43, 10000.0
  %v46 = vadd.f32 %v40, %v44
  %v47 = vadd.f32 %v41, %v45
  %48 = vst [vmem:[%s5] sm:$0xff] %v46
  %49 = vst [vmem:[%s5 + $0x8] sm:$0xff] %v47
  // Predicated region
  $region22: #{_fd4_pallas.1} parent=0 // pred_check
    _
  $region23: #{_fd4_pallas.1} parent=0 // pred_check_branch
    %51 = sbr.rel (0) target = $region25
  $region24: #{_fd4_pallas.1} parent=0 // pred_region
    _
  $region25: #{_fd4_pallas.1} parent=0 // pred_fallthru
    _
  // Predicated region
  $region26: #{_fd4_pallas.1} parent=0 // pred_check
    _
  $region27: #{_fd4_pallas.1} parent=0 // pred_check_branch
    %53 = sbr.rel (0) target = $region29
  $region28: #{_fd4_pallas.1} parent=0 // pred_region
    _
  $region29: #{_fd4_pallas.1} parent=0 // pred_fallthru
    _

</llo_original>
